<compile_context>
chip_gen: v7x
topology: tpu7x:2x2x1
jax: 0.10.0
libtpu: 0.0.40
codegen_flags: <defaults>
</compile_context>

<pallas_src>
import jax
import jax.numpy as jnp
from jax import lax
from jax.experimental import pallas as pl
from jax.experimental.pallas import tpu as pltpu


def _attention_kernel(dh_ref, enc_ref, w_ref, b_ref, ctx_ref, attn_ref):
    # Block views (one batch row per grid step):
    #   dh_ref   : (1, 1, H)     enc_ref  : (1, S, 2H)
    #   w_ref    : (H, 2H)       b_ref    : (1, 2H)
    #   ctx_ref  : (1, 1, 2H)    attn_ref : (1, 1, S)
    dh = dh_ref[0]                     # (1, H)
    enc = enc_ref[0]                   # (S, 2H)
    w = w_ref[...]                     # (H, 2H)   (already transposed in wrapper)
    b = b_ref[...]                     # (1, 2H)

    # output = self.W(decoder_hidden)                       -> (1, 2H)
    proj = jnp.dot(dh, w, preferred_element_type=jnp.float32) + b.astype(jnp.float32)

    # scores = bmm(proj, encoder_output^T): contract over 2H, no transpose
    # materialized in VMEM.                                  -> (1, S)
    scores = lax.dot_general(
        proj, enc, (((1,), (1,)), ((), ())),
        preferred_element_type=jnp.float32)

    # numerically stable softmax along S (fp32 throughout)
    m = jnp.max(scores, axis=-1, keepdims=True)
    p = jnp.exp(scores - m)
    denom = jnp.sum(p, axis=-1, keepdims=True)
    attn = p * pl.reciprocal(denom, approx=True)             # (1, S)

    attn_ref[0] = attn.astype(attn_ref.dtype)

    # context = bmm(attn, encoder_output)                    -> (1, 2H)
    ctx = jnp.dot(attn, enc, preferred_element_type=jnp.float32)
    ctx_ref[0] = ctx.astype(ctx_ref.dtype)


def attention_forward(decoder_hidden, encoder_output, w, b):
    """decoder_hidden [B,H], encoder_output [B,S,2H], w [2H,H], b [2H]."""
    B, H = decoder_hidden.shape
    _, S, H2 = encoder_output.shape
    assert H2 == 2 * H and w.shape == (H2, H) and b.shape == (H2,)

    # Layout plumbing belongs in the wrapper, not the kernel:
    #   - pre-transpose the Linear weight so the kernel never computes w.T
    #   - give decoder_hidden / outputs a size-1 middle dim so the batch grid
    #     axis is a leading block dim and every block's last two dims equal
    #     the full array dims.
    dh3 = decoder_hidden.reshape(B, 1, H)
    wT = jnp.transpose(w)              # [H, 2H]
    b2d = b.reshape(1, H2)

    out_dtype = decoder_hidden.dtype
    out_shapes = (
        jax.ShapeDtypeStruct((B, 1, H2), out_dtype),   # context (pre-squeeze)
        jax.ShapeDtypeStruct((B, 1, S), out_dtype),    # attention weights
    )

    in_itemsize = jnp.dtype(encoder_output.dtype).itemsize
    out_itemsize = jnp.dtype(out_dtype).itemsize
    flops = 2 * B * H * H2 + 2 * B * H2 * S + 2 * B * S * H2
    bytes_accessed = ((dh3.size + encoder_output.size + wT.size + b2d.size) * in_itemsize
                      + (B * H2 + B * S) * out_itemsize)
    cost = pl.CostEstimate(flops=flops, transcendentals=B * S,
                           bytes_accessed=bytes_accessed)

    # Per-grid-step footprint (inputs + outputs, fp32 working set), double
    # buffered, with generous headroom; capped at 32 MiB so it is valid on
    # v5e (16 MiB default scoped), v6e and v7x (64 MiB physical).
    block_bytes = (S * H2 + H + H * H2 + H2 + H2 + S) * 4
    vmem_limit = int(min(max(8 * block_bytes, 1 << 20), 32 << 20))

    ctx3, attn3 = pl.pallas_call(
        _attention_kernel,
        out_shape=out_shapes,
        grid=(B,),
        in_specs=[
            pl.BlockSpec((1, 1, H), lambda i: (i, 0, 0)),    # decoder_hidden
            pl.BlockSpec((1, S, H2), lambda i: (i, 0, 0)),   # encoder_output
            pl.BlockSpec((H, H2), lambda i: (0, 0)),         # W^T (resident)
            pl.BlockSpec((1, H2), lambda i: (0, 0)),         # bias (resident)
        ],
        out_specs=(
            pl.BlockSpec((1, 1, H2), lambda i: (i, 0, 0)),   # context
            pl.BlockSpec((1, 1, S), lambda i: (i, 0, 0)),    # attention weights
        ),
        compiler_params=pltpu.CompilerParams(
            dimension_semantics=("parallel",),
            vmem_limit_bytes=vmem_limit),
        cost_estimate=cost,
    )(dh3, encoder_output, wT, b2d)

    return ctx3.reshape(B, H2), attn3


def _reference(decoder_hidden, encoder_output, w, b):
    proj = decoder_hidden @ w.T + b                       # [B, 2H]
    scores = jnp.einsum("bd,bsd->bs", proj, encoder_output)
    attn = jax.nn.softmax(scores, axis=-1)
    ctx = jnp.einsum("bs,bsd->bd", attn, encoder_output)
    return ctx, attn[:, None, :]


if __name__ == "__main__":
    B, S, H = 2, 8, 32          # batch, seq, hidden_size

    key = jax.random.PRNGKey(0)
    k1, k2, k3, k4 = jax.random.split(key, 4)

    decoder_hidden = jax.random.normal(k1, (B, H), dtype=jnp.float32)
    encoder_output = jax.random.normal(k2, (B, S, 2 * H), dtype=jnp.float32)
    # nn.Linear(H, 2H) parameters, deterministic init
    w = jax.random.normal(k3, (2 * H, H), dtype=jnp.float32) * 0.1
    b = jax.random.normal(k4, (2 * H,), dtype=jnp.float32) * 0.1

    ctx, attn = attention_forward(decoder_hidden, encoder_output, w, b)
    jax.block_until_ready((ctx, attn))

    ref_ctx, ref_attn = _reference(decoder_hidden, encoder_output, w, b)
    assert ctx.shape == (B, 2 * H)
    assert attn.shape == (B, 1, S)
    # tolerance loosened slightly vs exact because the softmax denominator
    # uses the EUP approximate reciprocal (pl.reciprocal(approx=True)).
    assert jnp.allclose(ctx, ref_ctx, atol=5e-3, rtol=5e-3)
    assert jnp.allclose(attn, ref_attn, atol=5e-3, rtol=5e-3)

    print("KERNEL_OK")
</pallas_src>

<mosaic_0001>
module attributes {stable_mosaic.version = 11 : i64} {
  func.func @_attention_kernel(%arg0: i32, %arg1: memref<1x1x32xf32, #tpu.memory_space<vmem>>, %arg2: memref<1x8x64xf32, #tpu.memory_space<vmem>>, %arg3: memref<32x64xf32, #tpu.memory_space<vmem>>, %arg4: memref<1x64xf32, #tpu.memory_space<vmem>>, %arg5: memref<1x1x64xf32, #tpu.memory_space<vmem>>, %arg6: memref<1x1x8xf32, #tpu.memory_space<vmem>>) attributes {dimension_semantics = [#tpu.dimension_semantics<parallel>], iteration_bounds = array<i64: 2>, scalar_prefetch = 0 : i64, scratch_operands = 0 : i64, tpu.core_type = #tpu.core_type<tc>, window_params = [{transform_indices = @transform_0, window_bounds = array<i64: 1, 1, 32>}, {transform_indices = @transform_1, window_bounds = array<i64: 1, 8, 64>}, {pipeline_mode = #tpu.pipeline_mode<synchronous>, transform_indices = @transform_2, window_bounds = array<i64: 32, 64>}, {pipeline_mode = #tpu.pipeline_mode<synchronous>, transform_indices = @transform_3, window_bounds = array<i64: 1, 64>}, {transform_indices = @transform_4, window_bounds = array<i64: 1, 1, 64>}, {transform_indices = @transform_5, window_bounds = array<i64: 1, 1, 8>}]} {
    %c0 = arith.constant 0 : index
    %c0_0 = arith.constant 0 : index
    %c0_1 = arith.constant 0 : index
    %0 = vector.load %arg1[%c0, %c0_0, %c0_1] : memref<1x1x32xf32, #tpu.memory_space<vmem>>, vector<1x1x32xf32>
    %1 = vector.shape_cast %0 : vector<1x1x32xf32> to vector<1x32xf32>
    %c0_2 = arith.constant 0 : index
    %c0_3 = arith.constant 0 : index
    %c0_4 = arith.constant 0 : index
    %2 = vector.load %arg2[%c0_2, %c0_3, %c0_4] : memref<1x8x64xf32, #tpu.memory_space<vmem>>, vector<1x8x64xf32>
    %3 = vector.shape_cast %2 : vector<1x8x64xf32> to vector<8x64xf32>
    %c0_5 = arith.constant 0 : index
    %c0_6 = arith.constant 0 : index
    %4 = vector.load %arg3[%c0_5, %c0_6] : memref<32x64xf32, #tpu.memory_space<vmem>>, vector<32x64xf32>
    %c0_7 = arith.constant 0 : index
    %c0_8 = arith.constant 0 : index
    %5 = vector.load %arg4[%c0_7, %c0_8] : memref<1x64xf32, #tpu.memory_space<vmem>>, vector<1x64xf32>
    %cst = arith.constant dense<0.000000e+00> : vector<1x64xf32>
    %6 = tpu.matmul %1, %4, %cst {dimension_numbers = #tpu.dot_dimension_numbers<[1], [0], [0], [1], [0, 0, 1, 1], [], []>} : vector<1x32xf32>, vector<32x64xf32>, vector<1x64xf32> -> vector<1x64xf32>
    %7 = arith.addf %6, %5 : vector<1x64xf32>
    %cst_9 = arith.constant dense<0.000000e+00> : vector<1x8xf32>
    %8 = tpu.matmul %7, %3, %cst_9 {dimension_numbers = #tpu.dot_dimension_numbers<[1], [1], [0], [0], [0, 0, 1, 0], [], []>} : vector<1x64xf32>, vector<8x64xf32>, vector<1x8xf32> -> vector<1x8xf32>
    %cst_10 = arith.constant dense<0xFF800000> : vector<1xf32>
    %9 = vector.multi_reduction <maximumf>, %8, %cst_10 [1] : vector<1x8xf32> to vector<1xf32>
    %10 = vector.shape_cast %9 : vector<1xf32> to vector<1x1xf32>
    %11 = vector.broadcast %10 : vector<1x1xf32> to vector<1x8xf32>
    %12 = arith.subf %8, %11 : vector<1x8xf32>
    %13 = math.exp %12 : vector<1x8xf32>
    %cst_11 = arith.constant dense<0.000000e+00> : vector<1xf32>
    %14 = vector.multi_reduction <add>, %13, %cst_11 [1] : vector<1x8xf32> to vector<1xf32>
    %15 = vector.shape_cast %14 : vector<1xf32> to vector<1x1xf32>
    %16 = tpu.reciprocal %15 {approx = true} : vector<1x1xf32> -> vector<1x1xf32>
    %17 = vector.broadcast %16 : vector<1x1xf32> to vector<1x8xf32>
    %18 = arith.mulf %13, %17 : vector<1x8xf32>
    %c0_12 = arith.constant 0 : index
    %c0_13 = arith.constant 0 : index
    %c0_14 = arith.constant 0 : index
    %19 = vector.load %arg6[%c0_12, %c0_13, %c0_14] : memref<1x1x8xf32, #tpu.memory_space<vmem>>, vector<1x1x8xf32>
    %20 = vector.shape_cast %19 : vector<1x1x8xf32> to vector<1x8xf32>
    %21 = vector.shape_cast %18 : vector<1x8xf32> to vector<1x1x8xf32>
    tpu.vector_store %arg6[%c0_12, %c0_13, %c0_14], %21 {strides = array<i32>} : memref<1x1x8xf32, #tpu.memory_space<vmem>>, vector<1x1x8xf32>,
    %cst_15 = arith.constant dense<0.000000e+00> : vector<1x64xf32>
    %22 = tpu.matmul %18, %3, %cst_15 {dimension_numbers = #tpu.dot_dimension_numbers<[1], [0], [0], [1], [0, 0, 1, 1], [], []>} : vector<1x8xf32>, vector<8x64xf32>, vector<1x64xf32> -> vector<1x64xf32>
    %c0_16 = arith.constant 0 : index
    %c0_17 = arith.constant 0 : index
    %c0_18 = arith.constant 0 : index
    %23 = vector.load %arg5[%c0_16, %c0_17, %c0_18] : memref<1x1x64xf32, #tpu.memory_space<vmem>>, vector<1x1x64xf32>
    %24 = vector.shape_cast %23 : vector<1x1x64xf32> to vector<1x64xf32>
    %25 = vector.shape_cast %22 : vector<1x64xf32> to vector<1x1x64xf32>
    tpu.vector_store %arg5[%c0_16, %c0_17, %c0_18], %25 {strides = array<i32>} : memref<1x1x64xf32, #tpu.memory_space<vmem>>, vector<1x1x64xf32>,
    return
  }
  func.func @transform_0(%arg0: i32) -> (i32, i32, i32) {
    %c0_i32 = arith.constant 0 : i32
    %c0_i32_0 = arith.constant 0 : i32
    %c0_i32_1 = arith.constant 0 : i32
    return %arg0, %c0_i32, %c0_i32_0 : i32, i32, i32
  }
  func.func @transform_1(%arg0: i32) -> (i32, i32, i32) {
    %c0_i32 = arith.constant 0 : i32
    %c0_i32_0 = arith.constant 0 : i32
    %c0_i32_1 = arith.constant 0 : i32
    return %arg0, %c0_i32, %c0_i32_0 : i32, i32, i32
  }
  func.func @transform_2(%arg0: i32) -> (i32, i32) {
    %c0_i32 = arith.constant 0 : i32
    %c0_i32_0 = arith.constant 0 : i32
    %c0_i32_1 = arith.constant 0 : i32
    return %c0_i32, %c0_i32_0 : i32, i32
  }
  func.func @transform_3(%arg0: i32) -> (i32, i32) {
    %c0_i32 = arith.constant 0 : i32
    %c0_i32_0 = arith.constant 0 : i32
    %c0_i32_1 = arith.constant 0 : i32
    return %c0_i32, %c0_i32_0 : i32, i32
  }
  func.func @transform_4(%arg0: i32) -> (i32, i32, i32) {
    %c0_i32 = arith.constant 0 : i32
    %c0_i32_0 = arith.constant 0 : i32
    %c0_i32_1 = arith.constant 0 : i32
    return %arg0, %c0_i32, %c0_i32_0 : i32, i32, i32
  }
  func.func @transform_5(%arg0: i32) -> (i32, i32, i32) {
    %c0_i32 = arith.constant 0 : i32
    %c0_i32_0 = arith.constant 0 : i32
    %c0_i32_1 = arith.constant 0 : i32
    return %arg0, %c0_i32, %c0_i32_0 : i32, i32, i32
  }
}

</mosaic_0001>

<llo_original>
// kernel: tpu_custom_call.1
$region0: #{tpu_custom_call.1}
  #allocation0 [shape = 'u32[]', space=smem, size = 0x4, offset = 0x4, fixed_abs, tag = 'smem constant byte address 0x4 - core index']
  #allocation1 [shape = 'u32[144,128]{1,0:T(1,128)}', space=vmem, size = 0x12000, scoped, tag = 'internal scratch']
  %s0 = inlined_call_operand.hbm [shape: f32[2,1,32], index: 0, kind: input, shape index: {}]
  %s1 = inlined_call_operand.hbm [shape: f32[2,8,64], index: 1, kind: input, shape index: {}]
  %s2 = inlined_call_operand.hbm [shape: f32[32,64], index: 2, kind: input, shape index: {}]
  %s3 = inlined_call_operand.vmem [shape: f32[1,64], index: 3, kind: input, shape index: {}]
  %s4 = inlined_call_operand.hbm [shape: f32[2,1,64], index: 4, kind: output, shape index: {0}]
  %s5 = inlined_call_operand.hbm [shape: f32[2,1,8], index: 5, kind: output, shape index: {1}]
  %6 = xla_tuple %s4, %s5
  %s7 = sld [smem:[#allocation0]]
  $region69: #{tpu_custom_call.1} parent=0
    _
  %s9 = ssub.s32 1, %s7
  %s10 = scalar_select 0, %s9, %s7
  $region1: #{tpu_custom_call.1} parent=0
    #allocation2 [shape = 'u8[1024]{0}', space=vmem, size = 0x400, scoped, tag = 'input window, operand 0']
    #allocation3 [shape = 's32[2]{0}', space=sflag, size = 0x8, scoped, tag = 'scoped memory for tpu_custom_call.1']
    #allocation4 [shape = 's32[2]{0}', space=sflag, size = 0x8, scoped, tag = 'scoped memory for tpu_custom_call.1']
    #allocation5 [shape = 'u8[8192]{0}', space=vmem, size = 0x2000, scoped, tag = 'input window, operand 1']
    #allocation6 [shape = 's32[2]{0}', space=sflag, size = 0x8, scoped, tag = 'scoped memory for tpu_custom_call.1']
    #allocation7 [shape = 'u8[16384]{0}', space=vmem, size = 0x4000, scoped, tag = 'input window, operand 2, single buffered']
    #allocation8 [shape = 'u8[1024]{0}', space=vmem, size = 0x400, scoped, tag = 'output window, operand 0']
    #allocation9 [shape = 'u8[1024]{0}', space=vmem, size = 0x400, scoped, tag = 'output window, operand 1']
    #allocation10 [shape = 's32[2]{0}', space=sflag, size = 0x8, scoped, tag = 'scoped memory for tpu_custom_call.1']
    %11 = vsyncpa [#allocation3], 0
    %s12 = scalar_lea.sflag [#allocation3], 1
    %13 = vsyncpa %s12, 0
    %14 = vsyncpa [#allocation6], 0
    %s15 = scalar_lea.sflag [#allocation6], 1
    %16 = vsyncpa %s15, 0
    %17 = vsyncpa [#allocation4], 0
    %s18 = scalar_lea.sflag [#allocation4], 1
    %19 = vsyncpa %s18, 0
    %20 = vsyncpa [#allocation10], 0
    %s21 = scalar_lea.sflag [#allocation10], 1
    %22 = vsyncpa %s21, 0
    loop: start=0, step=1, limit=4
    $region2: #{tpu_custom_call.1} parent=1 // loop_pre_header
      _
    $region3: #{tpu_custom_call.1} parent=1 // loop_header
      %s24 = sphi 0, %s28
      %p25 = scmp.ge.s32.totalorder %s24, 4
      %s34 = sphi 0, %s36
      %s37 = sphi 0, %s34
      %s38 = sphi 0, %s37
      %s54 = sphi 0, %s38
      %s60 = sphi 0, %s62
      %s63 = sphi 0, %s60
      %s64 = sphi 0, %s63
      %s80 = sphi 0, %s64
      %s84 = sphi 0, %s84
      %s86 = sphi 0, %s84
      %s87 = sphi 0, %s86
      %s101 = sphi 0, %s87
      %s105 = sphi 0, %s105
      %s107 = sphi 0, %s105
      %s108 = sphi 0, %s107
      %s122 = sphi 0, %s108
      %s128 = sphi 0, %s130
      %s131 = sphi 0, %s128
      %s132 = sphi 0, %s131
      %s148 = sphi 0, %s132
      %s154 = sphi 0, %s156
      %s157 = sphi 0, %s154
      %s158 = sphi 0, %s157
      %s174 = sphi 0, %s158
    $region4: #{tpu_custom_call.1} parent=1 // loop_header_branch
      %27 = sbr.rel (%p25) target = $region8
    $region5: #{tpu_custom_call.1} parent=1 // loop_body
      %s29 = ssub.s32 %s24, 1
      %s30 = ssub.s32 %s24, 2
      %s31 = sadd.s32 %s24, 1
      %s32 = ssub.s32 %s24, %s31
      %p33 = scmp.eq.s32.totalorder %s32, 0
      %s35 = sadd.s32 %s34, 1
      %s36 = scalar_select %p33, %s34, %s35
      %p39 = pneg %p33
      %p40 = scmp.eq.s32.totalorder %s24, 1
      %p41 = por %p39, %p40
      %p42 = scmp.ne.s32.totalorder %s34, %s37
      %p43 = scmp.eq.s32.totalorder %s24, 0
      %p44 = por %p42, %p43
      %p45 = scmp.ne.s32.totalorder %s34, %s37
      %p46 = scmp.eq.s32.totalorder %s29, 1
      %p47 = por %p45, %p46
      %p48 = scmp.ne.s32.totalorder %s37, %s38
      %p49 = scmp.eq.s32.totalorder %s29, 0
      %p50 = por %p48, %p49
      %p51 = scmp.ne.s32.totalorder %s37, %s38
      %p52 = scmp.eq.s32.totalorder %s30, 1
      %p53 = por %p51, %p52
      %p55 = scmp.ne.s32.totalorder %s38, %s54
      %p56 = scmp.eq.s32.totalorder %s30, 0
      %p57 = por %p55, %p56
      %s58 = ssub.s32 %s24, %s31
      %p59 = scmp.eq.s32.totalorder %s58, 0
      %s61 = sadd.s32 %s60, 1
      %s62 = scalar_select %p59, %s60, %s61
      %p65 = pneg %p59
      %p66 = scmp.eq.s32.totalorder %s24, 1
      %p67 = por %p65, %p66
      %p68 = scmp.ne.s32.totalorder %s60, %s63
      %p69 = scmp.eq.s32.totalorder %s24, 0
      %p70 = por %p68, %p69
      %p71 = scmp.ne.s32.totalorder %s60, %s63
      %p72 = scmp.eq.s32.totalorder %s29, 1
      %p73 = por %p71, %p72
      %p74 = scmp.ne.s32.totalorder %s63, %s64
      %p75 = scmp.eq.s32.totalorder %s29, 0
      %p76 = por %p74, %p75
      %p77 = scmp.ne.s32.totalorder %s63, %s64
      %p78 = scmp.eq.s32.totalorder %s30, 1
      %p79 = por %p77, %p78
      %p81 = scmp.ne.s32.totalorder %s64, %s80
      %p82 = scmp.eq.s32.totalorder %s30, 0
      %p83 = por %p81, %p82
      %s85 = sadd.s32 %s84, 1
      %p88 = scmp.eq.s32.totalorder %s24, 1
      %p89 = scmp.ne.s32.totalorder %s84, %s86
      %p90 = scmp.eq.s32.totalorder %s24, 0
      %p91 = por %p89, %p90
      %p92 = scmp.ne.s32.totalorder %s84, %s86
      %p93 = scmp.eq.s32.totalorder %s29, 1
      %p94 = por %p92, %p93
      %p95 = scmp.ne.s32.totalorder %s86, %s87
      %p96 = scmp.eq.s32.totalorder %s29, 0
      %p97 = por %p95, %p96
      %p98 = scmp.ne.s32.totalorder %s86, %s87
      %p99 = scmp.eq.s32.totalorder %s30, 1
      %p100 = por %p98, %p99
      %p102 = scmp.ne.s32.totalorder %s87, %s101
      %p103 = scmp.eq.s32.totalorder %s30, 0
      %p104 = por %p102, %p103
      %s106 = sadd.s32 %s105, 1
      %p109 = scmp.eq.s32.totalorder %s24, 1
      %p110 = scmp.ne.s32.totalorder %s105, %s107
      %p111 = scmp.eq.s32.totalorder %s24, 0
      %p112 = por %p110, %p111
      %p113 = scmp.ne.s32.totalorder %s105, %s107
      %p114 = scmp.eq.s32.totalorder %s29, 1
      %p115 = por %p113, %p114
      %p116 = scmp.ne.s32.totalorder %s107, %s108
      %p117 = scmp.eq.s32.totalorder %s29, 0
      %p118 = por %p116, %p117
      %p119 = scmp.ne.s32.totalorder %s107, %s108
      %p120 = scmp.eq.s32.totalorder %s30, 1
      %p121 = por %p119, %p120
      %p123 = scmp.ne.s32.totalorder %s108, %s122
      %p124 = scmp.eq.s32.totalorder %s30, 0
      %p125 = por %p123, %p124
      %s126 = ssub.s32 %s24, %s31
      %p127 = scmp.eq.s32.totalorder %s126, 0
      %s129 = sadd.s32 %s128, 1
      %s130 = scalar_select %p127, %s128, %s129
      %p133 = pneg %p127
      %p134 = scmp.eq.s32.totalorder %s24, 1
      %p135 = por %p133, %p134
      %p136 = scmp.ne.s32.totalorder %s128, %s131
      %p137 = scmp.eq.s32.totalorder %s24, 0
      %p138 = por %p136, %p137
      %p139 = scmp.ne.s32.totalorder %s128, %s131
      %p140 = scmp.eq.s32.totalorder %s29, 1
      %p141 = por %p139, %p140
      %p142 = scmp.ne.s32.totalorder %s131, %s132
      %p143 = scmp.eq.s32.totalorder %s29, 0
      %p144 = por %p142, %p143
      %p145 = scmp.ne.s32.totalorder %s131, %s132
      %p146 = scmp.eq.s32.totalorder %s30, 1
      %p147 = por %p145, %p146
      %p149 = scmp.ne.s32.totalorder %s132, %s148
      %p150 = scmp.eq.s32.totalorder %s30, 0
      %p151 = por %p149, %p150
      %s152 = ssub.s32 %s24, %s31
      %p153 = scmp.eq.s32.totalorder %s152, 0
      %s155 = sadd.s32 %s154, 1
      %s156 = scalar_select %p153, %s154, %s155
      %p159 = pneg %p153
      %p160 = scmp.eq.s32.totalorder %s24, 1
      %p161 = por %p159, %p160
      %p162 = scmp.ne.s32.totalorder %s154, %s157
      %p163 = scmp.eq.s32.totalorder %s24, 0
      %p164 = por %p162, %p163
      %p165 = scmp.ne.s32.totalorder %s154, %s157
      %p166 = scmp.eq.s32.totalorder %s29, 1
      %p167 = por %p165, %p166
      %p168 = scmp.ne.s32.totalorder %s157, %s158
      %p169 = scmp.eq.s32.totalorder %s29, 0
      %p170 = por %p168, %p169
      %p171 = scmp.ne.s32.totalorder %s157, %s158
      %p172 = scmp.eq.s32.totalorder %s30, 1
      %p173 = por %p171, %p172
      %p175 = scmp.ne.s32.totalorder %s158, %s174
      %p176 = scmp.eq.s32.totalorder %s30, 0
      %p177 = por %p175, %p176
      %p178 = scmp.le.s32.totalorder 1, %s24
      %p179 = scmp.lt.s32.totalorder %s24, 3
      %p180 = pnand %p178, %p179
      %p181 = pneg %p180
      // Predicated region
      $region9: #{tpu_custom_call.1} parent=5 // pred_check
        _
      $region10: #{tpu_custom_call.1} parent=5 // pred_check_branch
        %183 = sbr.rel (%p180) target = $region12
      $region11: #{tpu_custom_call.1} parent=5 // pred_region
        %s184 = ssub.s32 %s24, 1
        // Predicated region
        $region13: #{tpu_custom_call.1} parent=11 // pred_check
          %p185 = pneg %p97
        $region14: #{tpu_custom_call.1} parent=11 // pred_check_branch
          %187 = sbr.rel (%p185) target = $region16
        $region15: #{tpu_custom_call.1} parent=11 // pred_region
          %s189 = ssub.s32 512, 512
          %190 = vsyncadd [#allocation6], %s189
          %s191 = sshll.u32 [#allocation7], 4
          %s192 = int_to_ptr.vmem [resolvable:$true] %s191
          %197 = dma.hbm_to_vmem [thread:$0]  %s2, 512, %s192, [#allocation6], 128, 128, 8
        $region16: #{tpu_custom_call.1} parent=11 // pred_fallthru
          _
        // Predicated region
        $region17: #{tpu_custom_call.1} parent=11 // pred_check
          %p198 = pneg %p118
        $region18: #{tpu_custom_call.1} parent=11 // pred_check_branch
          %200 = sbr.rel (%p198) target = $region20
        $region19: #{tpu_custom_call.1} parent=11 // pred_region
          _
        $region20: #{tpu_custom_call.1} parent=11 // pred_fallthru
          _
      $region12: #{tpu_custom_call.1} parent=5 // pred_fallthru
        _
      %p201 = scmp.lt.s32.totalorder %s24, 2
      // Predicated region
      $region21: #{tpu_custom_call.1} parent=5 // pred_check
        %p202 = pneg %p201
      $region22: #{tpu_custom_call.1} parent=5 // pred_check_branch
        %204 = sbr.rel (%p202) target = $region24
      $region23: #{tpu_custom_call.1} parent=5 // pred_region
        // Predicated region
        $region25: #{tpu_custom_call.1} parent=23 // pred_check
          %p205 = pneg %p44
        $region26: #{tpu_custom_call.1} parent=23 // pred_check_branch
          %207 = sbr.rel (%p205) target = $region28
        $region27: #{tpu_custom_call.1} parent=23 // pred_region
          %s208 = sand.u32 %s34, 1
          %s209 = scalar_lea.sflag [#allocation3], %s208
          %s210 = sand.u32 %s34, 1
          %s211 = scalar_lea.vmem [#allocation2], %s210
          %s213 = ssub.s32 16, 16
          %214 = vsyncadd %s209, %s213
          %s215 = smul.addr %s24, 16
          %s216 = scalar_lea.hbm %s0, %s215
          %s218 = sshll.u32 %s211, 4
          %s219 = int_to_ptr.vmem [resolvable:$true] %s218
          %221 = dma.hbm_to_vmem [thread:$0]  %s216, 16, %s219, %s209
        $region28: #{tpu_custom_call.1} parent=23 // pred_fallthru
          _
        // Predicated region
        $region29: #{tpu_custom_call.1} parent=23 // pred_check
          %p222 = pneg %p70
        $region30: #{tpu_custom_call.1} parent=23 // pred_check_branch
          %224 = sbr.rel (%p222) target = $region32
        $region31: #{tpu_custom_call.1} parent=23 // pred_region
          %s225 = sand.u32 %s24, 1
          %s226 = scalar_lea.sflag [#allocation6], %s225
          %s227 = sand.u32 %s60, 1
          %s228 = smul.addr %s227, 8
          %s229 = scalar_lea.vmem [#allocation5], %s228
          %s231 = ssub.s32 128, 128
          %232 = vsyncadd %s226, %s231
          %s233 = smul.addr %s24, 128
          %s234 = scalar_lea.hbm %s1, %s233
          %s236 = sshll.u32 %s229, 4
          %s237 = int_to_ptr.vmem [resolvable:$true] %s236
          %239 = dma.hbm_to_vmem [thread:$0]  %s234, 128, %s237, %s226
        $region32: #{tpu_custom_call.1} parent=23 // pred_fallthru
          _
      $region24: #{tpu_custom_call.1} parent=5 // pred_fallthru
        _
      %p240 = scmp.le.s32.totalorder 1, %s24
      %p241 = scmp.lt.s32.totalorder %s24, 3
      %p242 = pnand %p240, %p241
      %p243 = pneg %p242
      // Predicated region
      $region33: #{tpu_custom_call.1} parent=5 // pred_check
        _
      $region34: #{tpu_custom_call.1} parent=5 // pred_check_branch
        %245 = sbr.rel (%p242) target = $region36
      $region35: #{tpu_custom_call.1} parent=5 // pred_region
        %s246 = ssub.s32 %s24, 1
        %s247 = sand.u32 %s37, 1
        %s248 = scalar_lea.sflag [#allocation3], %s247
        %s249 = sand.u32 %s37, 1
        %s250 = scalar_lea.vmem [#allocation2], %s249
        // Predicated region
        $region37: #{tpu_custom_call.1} parent=35 // pred_check
          %p251 = pneg %p50
        $region38: #{tpu_custom_call.1} parent=35 // pred_check_branch
          %253 = sbr.rel (%p251) target = $region40
        $region39: #{tpu_custom_call.1} parent=35 // pred_region
          %254 = dma.done %s248, 16
        $region40: #{tpu_custom_call.1} parent=35 // pred_fallthru
          _
        %s255 = sand.u32 %s29, 1
        %s256 = scalar_lea.sflag [#allocation6], %s255
        %s257 = sand.u32 %s63, 1
        %s258 = smul.addr %s257, 8
        %s259 = scalar_lea.vmem [#allocation5], %s258
        // Predicated region
        $region41: #{tpu_custom_call.1} parent=35 // pred_check
          %p260 = pneg %p76
        $region42: #{tpu_custom_call.1} parent=35 // pred_check_branch
          %262 = sbr.rel (%p260) target = $region44
        $region43: #{tpu_custom_call.1} parent=35 // pred_region
          %263 = dma.done %s256, 128
        $region44: #{tpu_custom_call.1} parent=35 // pred_fallthru
          _
        // Predicated region
        $region45: #{tpu_custom_call.1} parent=35 // pred_check
          %p264 = pneg %p97
        $region46: #{tpu_custom_call.1} parent=35 // pred_check_branch
          %266 = sbr.rel (%p264) target = $region48
        $region47: #{tpu_custom_call.1} parent=35 // pred_region
          %267 = dma.done [#allocation6], 512
        $region48: #{tpu_custom_call.1} parent=35 // pred_fallthru
          _
        %s268 = sand.u32 %s37, 1
        %s269 = scalar_lea.sflag [#allocation3], %s268
        %s270 = sand.u32 %s37, 1
        %s271 = scalar_lea.vmem [#allocation2], %s270
        %p272 = pneg %p50
        %p273 = pneg %p47
        %s274 = sand.u32 %s29, 1
        %s275 = scalar_lea.sflag [#allocation6], %s274
        %s276 = sand.u32 %s63, 1
        %s277 = smul.addr %s276, 8
        %s278 = scalar_lea.vmem [#allocation5], %s277
        %p279 = pneg %p76
        %p280 = pneg %p73
        %p281 = pneg %p97
        %p282 = pneg %p94
        %p283 = pneg %p118
        %p284 = pneg %p115
        %p285 = pneg %p144
        %p286 = pneg %p141
        %s287 = sand.u32 %s131, 1
        %s288 = scalar_lea.sflag [#allocation4], %s287
        %s289 = sand.u32 %s131, 1
        %s290 = scalar_lea.vmem [#allocation8], %s289
        %p291 = pneg %p170
        %p292 = pneg %p167
        %s293 = sand.u32 %s157, 1
        %s294 = scalar_lea.sflag [#allocation10], %s293
        %s295 = sand.u32 %s157, 1
        %s296 = scalar_lea.vmem [#allocation9], %s295
        %v297 = vld [vmem:[%s250] sm:$0x1]
        %v298 = vld [vmem:[%s259] sm:$0xff]
        %v299 = vld [vmem:[#allocation7] sm:$0xff]
        %v300 = vld [vmem:[#allocation7 + $0x8] sm:$0xff]
        %v301 = vld [vmem:[#allocation7 + $0x10] sm:$0xff]
        %v302 = vld [vmem:[#allocation7 + $0x18] sm:$0xff]
        %v303 = vld [vmem:[%s3] sm:$0x1]
        %vm304 = vcmask 261120
        %v306 = vsel %vm304, %v297, 0
        %308 = vmatprep.subr.mxu0 0.0
        %309 = vmatpush1.msra.mxu0 %v299
        %310 = vmatprep.subr.mxu0 0.0
        %311 = vmatpush1.msra.mxu0 %v300
        %312 = vmatprep.subr.mxu0 0.0
        %313 = vmatpush1.msra.mxu0 %v301
        %314 = vmatprep.subr.mxu0 0.0
        %315 = vmatpush1.msra.mxu0 %v302
        %316 = vmatprep.subr.mxu0 0.0
        %317 = vmatpush1.msra.mxu0 0.0
        %318 = vmatprep.subr.mxu0 0.0
        %319 = vmatpush1.msra.mxu0 0.0
        %320 = vmatprep.subr.mxu0 0.0
        %321 = vmatpush1.msra.mxu0 0.0
        %322 = vmatprep.subr.mxu0 0.0
        %323 = vmatpush1.msra.mxu0 0.0
        %324 = vmatprep.subr.mxu0 0.0
        %325 = vmatpush1.msra.mxu0 0.0
        %326 = vmatprep.subr.mxu0 0.0
        %327 = vmatpush1.msra.mxu0 0.0
        %328 = vmatprep.subr.mxu0 0.0
        %329 = vmatpush1.msra.mxu0 0.0
        %330 = vmatprep.subr.mxu0 0.0
        %331 = vmatpush1.msra.mxu0 0.0
        %332 = vmatprep.subr.mxu0 0.0
        %333 = vmatpush1.msra.mxu0 0.0
        %334 = vmatprep.subr.mxu0 0.0
        %335 = vmatpush1.msra.mxu0 0.0
        %336 = vmatprep.subr.mxu0 0.0
        %337 = vmatpush1.msra.mxu0 0.0
        %338 = vmatprep.subr.mxu0 0.0
        %339 = vmatpush1.msra.mxu0 0.0
        %340 = vmatprep.subr.mxu0 0.0
        %341 = vmatpush1.msra.mxu0 0.0
        %342 = vmatprep.subr.mxu0 0.0
        %343 = vmatpush1.msra.mxu0 0.0
        %344 = vmatprep.subr.mxu0 0.0
        %345 = vmatpush1.msra.mxu0 0.0
        %346 = vmatprep.subr.mxu0 0.0
        %347 = vmatpush1.msra.mxu0 0.0
        %348 = vmatprep.subr.mxu0 0.0
        %349 = vmatpush1.msra.mxu0 0.0
        %350 = vmatprep.subr.mxu0 0.0
        %351 = vmatpush1.msra.mxu0 0.0
        %352 = vmatprep.subr.mxu0 0.0
        %353 = vmatpush1.msra.mxu0 0.0
        %354 = vmatprep.subr.mxu0 0.0
        %355 = vmatpush1.msra.mxu0 0.0
        %356 = vmatprep.subr.mxu0 0.0
        %357 = vmatpush1.msra.mxu0 0.0
        %358 = vmatprep.subr.mxu0 0.0
        %359 = vmatpush1.msra.mxu0 0.0
        %360 = vmatprep.subr.mxu0 0.0
        %361 = vmatpush1.msra.mxu0 0.0
        %362 = vmatprep.subr.mxu0 0.0
        %363 = vmatpush1.msra.mxu0 0.0
        %364 = vmatprep.subr.mxu0 0.0
        %365 = vmatpush1.msra.mxu0 0.0
        %366 = vmatprep.subr.mxu0 0.0
        %367 = vmatpush1.msra.mxu0 0.0
        %368 = vmatprep.subr.mxu0 0.0
        %369 = vmatpush1.msra.mxu0 0.0
        %370 = vmatprep.subr.mxu0 0.0
        %371 = vmatpush1.msra.mxu0 0.0
        %372 = vmatprep.mubr.f32.mxu0 0.0
        %373 = vmatmul.mubr.f32.gmra.mrb[0].mxu0 %v306
        %v374 = vpop.f32.mrb[0].mxu0
        %v375 = vadd.f32 %v303, %v374
        %v376 = vpop.f32.mrb[0].mxu0
        %377 = vdwg.mxu0
        %vm378 = vcmask 523264
        %v380 = vsel %vm378, %v375, 0
        %v383 = vsel %vm378, %v298, 0
        %385 = vmatprep.subr.mxu0 0.0
        %386 = vmatpush1.xpose.msra.mxu0 %v383
        %387 = vmatprep.subr.mxu0 0.0
        %388 = vmatpush1.xpose.msra.mxu0 0.0
        %389 = vmatprep.subr.mxu0 0.0
        %390 = vmatpush1.xpose.msra.mxu0 0.0
        %391 = vmatprep.subr.mxu0 0.0
        %392 = vmatpush1.xpose.msra.mxu0 0.0
        %393 = vmatprep.subr.mxu0 0.0
        %394 = vmatpush1.xpose.msra.mxu0 0.0
        %395 = vmatprep.subr.mxu0 0.0
        %396 = vmatpush1.xpose.msra.mxu0 0.0
        %397 = vmatprep.subr.mxu0 0.0
        %398 = vmatpush1.xpose.msra.mxu0 0.0
        %399 = vmatprep.subr.mxu0 0.0
        %400 = vmatpush1.xpose.msra.mxu0 0.0
        %401 = vmatprep.subr.mxu0 0.0
        %402 = vmatpush1.xpose.msra.mxu0 0.0
        %403 = vmatprep.subr.mxu0 0.0
        %404 = vmatpush1.xpose.msra.mxu0 0.0
        %405 = vmatprep.subr.mxu0 0.0
        %406 = vmatpush1.xpose.msra.mxu0 0.0
        %407 = vmatprep.subr.mxu0 0.0
        %408 = vmatpush1.xpose.msra.mxu0 0.0
        %409 = vmatprep.subr.mxu0 0.0
        %410 = vmatpush1.xpose.msra.mxu0 0.0
        %411 = vmatprep.subr.mxu0 0.0
        %412 = vmatpush1.xpose.msra.mxu0 0.0
        %413 = vmatprep.subr.mxu0 0.0
        %414 = vmatpush1.xpose.msra.mxu0 0.0
        %415 = vmatprep.subr.mxu0 0.0
        %416 = vmatpush1.xpose.msra.mxu0 0.0
        %417 = vmatprep.subr.mxu0 0.0
        %418 = vmatpush1.xpose.msra.mxu0 0.0
        %419 = vmatprep.subr.mxu0 0.0
        %420 = vmatpush1.xpose.msra.mxu0 0.0
        %421 = vmatprep.subr.mxu0 0.0
        %422 = vmatpush1.xpose.msra.mxu0 0.0
        %423 = vmatprep.subr.mxu0 0.0
        %424 = vmatpush1.xpose.msra.mxu0 0.0
        %425 = vmatprep.subr.mxu0 0.0
        %426 = vmatpush1.xpose.msra.mxu0 0.0
        %427 = vmatprep.subr.mxu0 0.0
        %428 = vmatpush1.xpose.msra.mxu0 0.0
        %429 = vmatprep.subr.mxu0 0.0
        %430 = vmatpush1.xpose.msra.mxu0 0.0
        %431 = vmatprep.subr.mxu0 0.0
        %432 = vmatpush1.xpose.msra.mxu0 0.0
        %433 = vmatprep.subr.mxu0 0.0
        %434 = vmatpush1.xpose.msra.mxu0 0.0
        %435 = vmatprep.subr.mxu0 0.0
        %436 = vmatpush1.xpose.msra.mxu0 0.0
        %437 = vmatprep.subr.mxu0 0.0
        %438 = vmatpush1.xpose.msra.mxu0 0.0
        %439 = vmatprep.subr.mxu0 0.0
        %440 = vmatpush1.xpose.msra.mxu0 0.0
        %441 = vmatprep.subr.mxu0 0.0
        %442 = vmatpush1.xpose.msra.mxu0 0.0
        %443 = vmatprep.subr.mxu0 0.0
        %444 = vmatpush1.xpose.msra.mxu0 0.0
        %445 = vmatprep.subr.mxu0 0.0
        %446 = vmatpush1.xpose.msra.mxu0 0.0
        %447 = vmatprep.subr.mxu0 0.0
        %448 = vmatpush1.xpose.msra.mxu0 0.0
        %449 = vmatprep.mubr.f32.mxu0 0.0
        %450 = vmatmul.mubr.f32.gmra.mrb[0].mxu0 %v380
        %v451 = vpop.f32.mrb[0].mxu0
        %v452 = vadd.f32 0.0, %v451
        %v453 = vpop.f32.mrb[0].mxu0
        %454 = vdwg.mxu0
        %vm455 = vcmask 57344
        %v456 = vsel %vm455, %v452, -inf
        %457 = vmax.xlane.f32.xlu0 %v456
        %v458 = vpop.xlane.xlu0 %457
        %v459 = vsub.f32 %v452, %v458
        %v460 = vmul.f32 %v459, 1.442695
        %v461 = vpow.pop %v460
        %v462 = vsel %vm455, %v461, 0.0
        %463 = vadd.xlane.f32.xlu0 %v462
        %v464 = vpop.xlane.xlu0 %463
        %v465 = vrcp.pop %v464
        %v466 = vmul.f32 %v461, %v465
        %467 = vst.msk [vmem:[%s296] sm:$0x1] %vm455, %v466
        %vm468 = vcmask 64512
        %v470 = vsel %vm468, %v466, 0
        %472 = vmatprep.subr.mxu0 0.0
        %473 = vmatpush1.msra.mxu0 %v298
        %474 = vmatprep.subr.mxu0 0.0
        %475 = vmatpush1.msra.mxu0 0.0
        %476 = vmatprep.subr.mxu0 0.0
        %477 = vmatpush1.msra.mxu0 0.0
        %478 = vmatprep.subr.mxu0 0.0
        %479 = vmatpush1.msra.mxu0 0.0
        %480 = vmatprep.subr.mxu0 0.0
        %481 = vmatpush1.msra.mxu0 0.0
        %482 = vmatprep.subr.mxu0 0.0
        %483 = vmatpush1.msra.mxu0 0.0
        %484 = vmatprep.subr.mxu0 0.0
        %485 = vmatpush1.msra.mxu0 0.0
        %486 = vmatprep.subr.mxu0 0.0
        %487 = vmatpush1.msra.mxu0 0.0
        %488 = vmatprep.subr.mxu0 0.0
        %489 = vmatpush1.msra.mxu0 0.0
        %490 = vmatprep.subr.mxu0 0.0
        %491 = vmatpush1.msra.mxu0 0.0
        %492 = vmatprep.subr.mxu0 0.0
        %493 = vmatpush1.msra.mxu0 0.0
        %494 = vmatprep.subr.mxu0 0.0
        %495 = vmatpush1.msra.mxu0 0.0
        %496 = vmatprep.subr.mxu0 0.0
        %497 = vmatpush1.msra.mxu0 0.0
        %498 = vmatprep.subr.mxu0 0.0
        %499 = vmatpush1.msra.mxu0 0.0
        %500 = vmatprep.subr.mxu0 0.0
        %501 = vmatpush1.msra.mxu0 0.0
        %502 = vmatprep.subr.mxu0 0.0
        %503 = vmatpush1.msra.mxu0 0.0
        %504 = vmatprep.subr.mxu0 0.0
        %505 = vmatpush1.msra.mxu0 0.0
        %506 = vmatprep.subr.mxu0 0.0
        %507 = vmatpush1.msra.mxu0 0.0
        %508 = vmatprep.subr.mxu0 0.0
        %509 = vmatpush1.msra.mxu0 0.0
        %510 = vmatprep.subr.mxu0 0.0
        %511 = vmatpush1.msra.mxu0 0.0
        %512 = vmatprep.subr.mxu0 0.0
        %513 = vmatpush1.msra.mxu0 0.0
        %514 = vmatprep.subr.mxu0 0.0
        %515 = vmatpush1.msra.mxu0 0.0
        %516 = vmatprep.subr.mxu0 0.0
        %517 = vmatpush1.msra.mxu0 0.0
        %518 = vmatprep.subr.mxu0 0.0
        %519 = vmatpush1.msra.mxu0 0.0
        %520 = vmatprep.subr.mxu0 0.0
        %521 = vmatpush1.msra.mxu0 0.0
        %522 = vmatprep.subr.mxu0 0.0
        %523 = vmatpush1.msra.mxu0 0.0
        %524 = vmatprep.subr.mxu0 0.0
        %525 = vmatpush1.msra.mxu0 0.0
        %526 = vmatprep.subr.mxu0 0.0
        %527 = vmatpush1.msra.mxu0 0.0
        %528 = vmatprep.subr.mxu0 0.0
        %529 = vmatpush1.msra.mxu0 0.0
        %530 = vmatprep.subr.mxu0 0.0
        %531 = vmatpush1.msra.mxu0 0.0
        %532 = vmatprep.subr.mxu0 0.0
        %533 = vmatpush1.msra.mxu0 0.0
        %534 = vmatprep.subr.mxu0 0.0
        %535 = vmatpush1.msra.mxu0 0.0
        %536 = vmatprep.mubr.f32.mxu0 0.0
        %537 = vmatmul.mubr.f32.gmra.mrb[0].mxu0 %v470
        %v538 = vpop.f32.mrb[0].mxu0
        %v539 = vadd.f32 0.0, %v538
        %v540 = vpop.f32.mrb[0].mxu0
        %541 = vdwg.mxu0
        %vm542 = vcmask 516096
        %543 = vst.msk [vmem:[%s290] sm:$0x1] %vm542, %v539
        %s544 = sand.u32 %s131, 1
        %s545 = scalar_lea.sflag [#allocation4], %s544
        %s546 = sand.u32 %s131, 1
        %s547 = scalar_lea.vmem [#allocation8], %s546
        %s548 = sand.u32 %s157, 1
        %s549 = scalar_lea.sflag [#allocation10], %s548
        %s550 = sand.u32 %s157, 1
        %s551 = scalar_lea.vmem [#allocation9], %s550
        // Predicated region
        $region49: #{tpu_custom_call.1} parent=35 // pred_check
          %p552 = pneg %p141
        $region50: #{tpu_custom_call.1} parent=35 // pred_check_branch
          %554 = sbr.rel (%p552) target = $region52
        $region51: #{tpu_custom_call.1} parent=35 // pred_region
          %s556 = ssub.s32 16, 16
          %557 = vsyncadd %s545, %s556
          %s558 = smul.addr %s29, 16
          %s559 = scalar_lea.hbm %s4, %s558
          %s561 = sshll.u32 %s547, 4
          %s562 = int_to_ptr.vmem [resolvable:$true] %s561
          %564 = dma.vmem_to_hbm [thread:$0]  %s562, 16, %s559, %s545
        $region52: #{tpu_custom_call.1} parent=35 // pred_fallthru
          _
        // Predicated region
        $region53: #{tpu_custom_call.1} parent=35 // pred_check
          %p565 = pneg %p167
        $region54: #{tpu_custom_call.1} parent=35 // pred_check_branch
          %567 = sbr.rel (%p565) target = $region56
        $region55: #{tpu_custom_call.1} parent=35 // pred_region
          %s569 = ssub.s32 16, 16
          %570 = vsyncadd %s549, %s569
          %s571 = smul.addr %s29, 16
          %s572 = scalar_lea.hbm %s5, %s571
          %s574 = sshll.u32 %s551, 4
          %s575 = int_to_ptr.vmem [resolvable:$true] %s574
          %577 = dma.vmem_to_hbm [thread:$0]  %s575, 16, %s572, %s549
        $region56: #{tpu_custom_call.1} parent=35 // pred_fallthru
          _
      $region36: #{tpu_custom_call.1} parent=5 // pred_fallthru
        _
      %p578 = scmp.le.s32.totalorder 2, %s24
      // Predicated region
      $region57: #{tpu_custom_call.1} parent=5 // pred_check
        %p579 = pneg %p578
      $region58: #{tpu_custom_call.1} parent=5 // pred_check_branch
        %581 = sbr.rel (%p579) target = $region60
      $region59: #{tpu_custom_call.1} parent=5 // pred_region
        %s582 = ssub.s32 %s24, 2
        // Predicated region
        $region61: #{tpu_custom_call.1} parent=59 // pred_check
          %p583 = pneg %p147
        $region62: #{tpu_custom_call.1} parent=59 // pred_check_branch
          %585 = sbr.rel (%p583) target = $region64
        $region63: #{tpu_custom_call.1} parent=59 // pred_region
          %s586 = sand.u32 %s132, 1
          %s587 = scalar_lea.sflag [#allocation4], %s586
          %s588 = sand.u32 %s132, 1
          %s589 = scalar_lea.vmem [#allocation8], %s588
          %590 = dma.done %s587, 16
        $region64: #{tpu_custom_call.1} parent=59 // pred_fallthru
          _
        // Predicated region
        $region65: #{tpu_custom_call.1} parent=59 // pred_check
          %p591 = pneg %p173
        $region66: #{tpu_custom_call.1} parent=59 // pred_check_branch
          %593 = sbr.rel (%p591) target = $region68
        $region67: #{tpu_custom_call.1} parent=59 // pred_region
          %s594 = sand.u32 %s158, 1
          %s595 = scalar_lea.sflag [#allocation10], %s594
          %s596 = sand.u32 %s158, 1
          %s597 = scalar_lea.vmem [#allocation9], %s596
          %598 = dma.done %s595, 16
        $region68: #{tpu_custom_call.1} parent=59 // pred_fallthru
          _
      $region60: #{tpu_custom_call.1} parent=5 // pred_fallthru
        _
    $region6: #{tpu_custom_call.1} parent=1 // loop_footer
      %s28 = sadd.s32 1, %s24
    $region7: #{tpu_custom_call.1} parent=1 // loop_footer_branch
      %23 = sbr.rel target = $region3
    $region8: #{tpu_custom_call.1} parent=1 // loop_exit
      _
    %599 = vsyncpa [#allocation3], 1
    %s600 = scalar_lea.sflag [#allocation3], 1
    %601 = vsyncpa %s600, 1
    %602 = vsyncpa [#allocation6], 1
    %s603 = scalar_lea.sflag [#allocation6], 1
    %604 = vsyncpa %s603, 1
    %605 = vsyncpa [#allocation4], 1
    %s606 = scalar_lea.sflag [#allocation4], 1
    %607 = vsyncpa %s606, 1
    %608 = vsyncpa [#allocation10], 1
    %s609 = scalar_lea.sflag [#allocation10], 1
    %610 = vsyncpa %s609, 1

</llo_original>
